<compile_context>
chip_gen: v5e
topology: v5e:2x2
jax: 0.10.0
libtpu: 0.0.40
codegen_flags: <defaults>
</compile_context>

<pallas_src>
import jax
import jax.numpy as jnp
from jax.experimental import pallas as pl
from jax.experimental.pallas import tpu as pltpu


def _round_up(x, m):
    return ((x + m - 1) // m) * m


# ----------------------------------------------------------------------------
# Kernels
# ----------------------------------------------------------------------------
def encoder_kernel_resident(x_ref, w1_ref, b1_ref, wh_ref, bh_ref, mask_ref, out_ref):
    """All weights VMEM-resident; one row tile per grid step."""
    # Hidden layer + ReLU: bf16 MXU matmul with f32 accumulation, f32 epilogue.
    h = jnp.dot(x_ref[...], w1_ref[...], preferred_element_type=jnp.float32)
    h = jnp.maximum(h + b1_ref[...], 0.0)

    # Fused heads: columns are [ mu | 0.5*logvar | zero-pad ] in one MXU pass.
    heads = jnp.dot(h.astype(wh_ref.dtype), wh_ref[...],
                    preferred_element_type=jnp.float32)
    heads = heads + bh_ref[...]

    # mu lanes stay linear; sigma / pad lanes go through exp (EUP slot).
    out_ref[...] = jnp.where(mask_ref[...] != 0, heads,
                             jnp.exp(heads)).astype(out_ref.dtype)


def encoder_kernel_ktiled(x_ref, w1_ref, b1_ref, wh_ref, bh_ref, mask_ref,
                          out_ref, acc_ref):
    """Fallback: tile the hidden dim (contraction of the head matmul) so big
    W1 / W_heads never have to be fully VMEM-resident."""
    k = pl.program_id(1)

    @pl.when(k == 0)
    def _():
        acc_ref[...] = jnp.zeros_like(acc_ref)

    # Slice of hidden activations for this k block (independent across k).
    h = jnp.dot(x_ref[...], w1_ref[...], preferred_element_type=jnp.float32)
    h = jnp.maximum(h + b1_ref[...], 0.0)
    acc_ref[...] += jnp.dot(h.astype(wh_ref.dtype), wh_ref[...],
                            preferred_element_type=jnp.float32)

    @pl.when(k == pl.num_programs(1) - 1)
    def _():
        heads = acc_ref[...] + bh_ref[...]
        out_ref[...] = jnp.where(mask_ref[...] != 0, heads,
                                 jnp.exp(heads)).astype(out_ref.dtype)


# ----------------------------------------------------------------------------
# Parameter preparation (one-time transform)
# ----------------------------------------------------------------------------
def prepare_params(w1, b1, wmu, bmu, wlv, blv, *, compute_dtype=jnp.bfloat16):
    """Fuse heads, fold 0.5 into the logvar head, pad hidden (and large
    misaligned input) dims to multiples of 128, build the mu-lane mask, and
    cast matmul operands to the compute dtype."""
    input_dim, hidden_dim = w1.shape
    latent_dim = wmu.shape[1]

    b1 = b1.reshape(1, -1)
    wh = jnp.concatenate([wmu, 0.5 * wlv], axis=1)
    bh = jnp.concatenate([bmu.reshape(1, -1), 0.5 * blv.reshape(1, -1)], axis=1)

    # Lane-dense fused head width.
    n_heads = 2 * latent_dim
    n_pad = _round_up(max(n_heads, 128), 128)
    wh = jnp.pad(wh, ((0, 0), (0, n_pad - n_heads)))
    bh = jnp.pad(bh, ((0, 0), (0, n_pad - n_heads)))

    # Pad hidden dim to a multiple of 128: zero cols of W1 + zero b1 give
    # relu(0)=0, and zero rows of W_heads contribute nothing.
    hid_pad = _round_up(max(hidden_dim, 128), 128)
    w1 = jnp.pad(w1, ((0, 0), (0, hid_pad - hidden_dim)))
    b1 = jnp.pad(b1, ((0, 0), (0, hid_pad - hidden_dim)))
    wh = jnp.pad(wh, ((0, hid_pad - hidden_dim), (0, 0)))

    # Pad a large-but-misaligned input dim (x gets the matching pad in the
    # wrapper). Never pad a tiny input dim: that only inflates the x HBM read.
    if input_dim >= 256 and input_dim % 128 != 0:
        in_pad = _round_up(input_dim, 128)
        w1 = jnp.pad(w1, ((0, in_pad - input_dim), (0, 0)))
    else:
        in_pad = input_dim

    # 1 -> mu lane (linear), 0 -> sigma / pad lane (exp).
    mask = (jnp.arange(n_pad, dtype=jnp.int32) < latent_dim).astype(jnp.int32)[None, :]

    return dict(
        w1=w1.astype(compute_dtype), b1=b1.astype(jnp.float32),
        wh=wh.astype(compute_dtype), bh=bh.astype(jnp.float32),
        mask=mask,
        input_dim=input_dim, in_pad=in_pad,
        hidden_dim=hidden_dim, hid_pad=hid_pad,
        latent_dim=latent_dim, n_pad=n_pad,
        compute_dtype=compute_dtype,
    )


# ----------------------------------------------------------------------------
# Forward pass
# ----------------------------------------------------------------------------
def encoder_forward(x, params, *, block_rows=512, force_k_tiled=False,
                    k_block=None, vmem_budget_bytes=24 * 1024 * 1024):
    """x: [B, input_dim] -> (mu [B, latent], sigma [B, latent])."""
    B, input_dim = x.shape
    assert input_dim == params["input_dim"]

    cdt = params["compute_dtype"]
    in_pad, hid_pad = params["in_pad"], params["hid_pad"]
    n_pad, latent_dim = params["n_pad"], params["latent_dim"]
    w1, b1 = params["w1"], params["b1"]
    wh, bh, mask = params["wh"], params["bh"], params["mask"]

    # bf16 MXU operand for x (also halves the x DMA bytes).
    x = x.astype(cdt)
    if in_pad > input_dim:
        x = jnp.pad(x, ((0, 0), (0, in_pad - input_dim)))

    # Row tile: large by default (near HBM roofline), multiple of the sublane
    # granularity, >= 2 grid blocks when possible (v7x: both TensorCores), and
    # padding waste bounded by round_up(cdiv(B, n_blocks), sub).
    sub = 16 if cdt == jnp.bfloat16 else 8
    block_rows = max(sub, (block_rows // sub) * sub)
    n_blocks = pl.cdiv(B, block_rows)
    if B > sub:
        n_blocks = max(n_blocks, 2)
    tm = min(block_rows, _round_up(pl.cdiv(B, n_blocks), sub))
    pB = _round_up(B, tm)
    if pB > B:
        x = jnp.pad(x, ((0, pB - B), (0, 0)))
    grid_rows = pB // tm

    out_shape = jax.ShapeDtypeStruct((pB, n_pad), jnp.float32)

    itemsize = jnp.dtype(cdt).itemsize
    # Worst case: Pallas double-buffers even grid-invariant inputs by default.
    resident_weight_bytes = 2 * (w1.size * itemsize + wh.size * itemsize
                                 + 4 * (b1.size + bh.size + mask.size))
    stream_bytes = 2 * (tm * in_pad * itemsize + tm * n_pad * 4)
    use_k_tiled = force_k_tiled or (resident_weight_bytes + stream_bytes
                                    > vmem_budget_bytes)

    cost = pl.CostEstimate(
        flops=2 * pB * (in_pad * hid_pad + hid_pad * n_pad),
        transcendentals=pB * n_pad,
        bytes_accessed=(pB * in_pad * itemsize
                        + (w1.size + wh.size) * itemsize
                        + 4 * (b1.size + bh.size + mask.size)
                        + pB * n_pad * 4),
    )

    if not use_k_tiled:
        def run(single_buffer):
            def const_spec(shape):
                # Grid-invariant operand: stays VMEM-resident across row tiles.
                if single_buffer:
                    return pl.BlockSpec(shape, lambda i: (0,) * len(shape),
                                        pipeline_mode=pl.Buffered(1))
                return pl.BlockSpec(shape, lambda i: (0,) * len(shape))

            return pl.pallas_call(
                encoder_kernel_resident,
                out_shape=out_shape,
                grid=(grid_rows,),
                in_specs=[
                    pl.BlockSpec((tm, in_pad), lambda i: (i, 0)),   # x row tiles
                    const_spec((in_pad, hid_pad)),                  # W1
                    const_spec((1, hid_pad)),                       # b1
                    const_spec((hid_pad, n_pad)),                   # W_heads
                    const_spec((1, n_pad)),                         # b_heads
                    const_spec((1, n_pad)),                         # mu-lane mask
                ],
                out_specs=pl.BlockSpec((tm, n_pad), lambda i: (i, 0)),
                compiler_params=pltpu.CompilerParams(
                    dimension_semantics=("parallel",)),
                cost_estimate=cost,
            )(x, w1, b1, wh, bh, mask)

        try:
            # Single-buffer the grid-invariant weights (halves their VMEM use).
            out = run(single_buffer=True)
        except Exception:
            # pipeline_mode / Buffered(1) unsupported: default double-buffering.
            out = run(single_buffer=False)
    else:
        tk = k_block
        if tk is None:
            tk = 128
            for cand in (512, 384, 256, 128):
                if hid_pad % cand == 0:
                    tk = cand
                    break
        assert tk % 128 == 0 and hid_pad % tk == 0

        out = pl.pallas_call(
            encoder_kernel_ktiled,
            out_shape=out_shape,
            grid=(grid_rows, hid_pad // tk),
            in_specs=[
                pl.BlockSpec((tm, in_pad), lambda i, k: (i, 0)),   # x (resident over k)
                pl.BlockSpec((in_pad, tk), lambda i, k: (0, k)),   # W1 k-slice
                pl.BlockSpec((1, tk), lambda i, k: (0, k)),        # b1 k-slice
                pl.BlockSpec((tk, n_pad), lambda i, k: (k, 0)),    # W_heads k-slice
                pl.BlockSpec((1, n_pad), lambda i, k: (0, 0)),     # b_heads
                pl.BlockSpec((1, n_pad), lambda i, k: (0, 0)),     # mask
            ],
            out_specs=pl.BlockSpec((tm, n_pad), lambda i, k: (i, 0)),
            scratch_shapes=[pltpu.VMEM((tm, n_pad), jnp.float32)],
            compiler_params=pltpu.CompilerParams(
                dimension_semantics=("parallel", "arbitrary")),
            cost_estimate=cost,
        )(x, w1, b1, wh, bh, mask)

    mu = out[:B, :latent_dim]
    sigma = out[:B, latent_dim:2 * latent_dim]
    return mu, sigma


# ----------------------------------------------------------------------------
# Init / test
# ----------------------------------------------------------------------------
def init_params(key, input_dim, hidden_dim, latent_dim, dtype=jnp.float32):
    """Deterministic PyTorch-Linear-style uniform init; weights stored [in, out]."""
    ks = jax.random.split(key, 6)

    def linear_init(kw, kb, fan_in, fan_out):
        bound = 1.0 / (fan_in ** 0.5)
        w = jax.random.uniform(kw, (fan_in, fan_out), dtype, -bound, bound)
        b = jax.random.uniform(kb, (1, fan_out), dtype, -bound, bound)
        return w, b

    w1, b1 = linear_init(ks[0], ks[1], input_dim, hidden_dim)
    wmu, bmu = linear_init(ks[2], ks[3], hidden_dim, latent_dim)
    wlv, blv = linear_init(ks[4], ks[5], hidden_dim, latent_dim)
    return w1, b1, wmu, bmu, wlv, blv


if __name__ == "__main__":
    B, input_dim, hidden_dim, latent_dim = 32, 48, 192, 12

    key = jax.random.PRNGKey(0)
    k_x, k_p = jax.random.split(key)
    x = jax.random.normal(k_x, (B, input_dim), jnp.float32)
    raw = init_params(k_p, input_dim, hidden_dim, latent_dim)

    params = prepare_params(*raw)

    # Fast path: resident weights, 2 row blocks.
    mu, sigma = encoder_forward(x, params)
    # Force the K-tiled fallback (used when weights outgrow VMEM) with 2 k
    # blocks to exercise the accumulator / pl.when structure as well.
    mu_kt, sigma_kt = encoder_forward(x, params, force_k_tiled=True, k_block=128)
    jax.block_until_ready((mu, sigma, mu_kt, sigma_kt))

    # Pure-JAX f32 reference against the un-fused parameters.
    w1r, b1r, wmu, bmu, wlv, blv = raw
    h_ref = jnp.maximum(x @ w1r + b1r, 0.0)
    mu_ref = h_ref @ wmu + bmu
    sigma_ref = jnp.exp(0.5 * (h_ref @ wlv + blv))

    assert mu.shape == (B, latent_dim) and sigma.shape == (B, latent_dim)
    # bf16 MXU operands -> loose tolerance vs the pure-f32 reference.
    assert jnp.allclose(mu, mu_ref, atol=2e-2, rtol=2e-2)
    assert jnp.allclose(sigma, sigma_ref, atol=2e-2, rtol=2e-2)
    assert jnp.allclose(mu_kt, mu_ref, atol=2e-2, rtol=2e-2)
    assert jnp.allclose(sigma_kt, sigma_ref, atol=2e-2, rtol=2e-2)

    print("KERNEL_OK")
</pallas_src>

<mosaic_0001>
module attributes {stable_mosaic.version = 11 : i64} {
  func.func @encoder_kernel_resident(%arg0: i32, %arg1: memref<16x48xbf16, #tpu.memory_space<vmem>>, %arg2: memref<48x256xbf16, #tpu.memory_space<vmem>>, %arg3: memref<1x256xf32, #tpu.memory_space<vmem>>, %arg4: memref<256x128xbf16, #tpu.memory_space<vmem>>, %arg5: memref<1x128xf32, #tpu.memory_space<vmem>>, %arg6: memref<1x128xi32, #tpu.memory_space<vmem>>, %arg7: memref<16x128xf32, #tpu.memory_space<vmem>>) attributes {dimension_semantics = [#tpu.dimension_semantics<parallel>], iteration_bounds = array<i64: 2>, scalar_prefetch = 0 : i64, scratch_operands = 0 : i64, tpu.core_type = #tpu.core_type<tc>, window_params = [{transform_indices = @transform_0, window_bounds = array<i64: 16, 48>}, {pipeline_mode = #tpu.pipeline_mode<synchronous>, transform_indices = @transform_1, window_bounds = array<i64: 48, 256>}, {pipeline_mode = #tpu.pipeline_mode<synchronous>, transform_indices = @transform_2, window_bounds = array<i64: 1, 256>}, {pipeline_mode = #tpu.pipeline_mode<synchronous>, transform_indices = @transform_3, window_bounds = array<i64: 256, 128>}, {pipeline_mode = #tpu.pipeline_mode<synchronous>, transform_indices = @transform_4, window_bounds = array<i64: 1, 128>}, {pipeline_mode = #tpu.pipeline_mode<synchronous>, transform_indices = @transform_5, window_bounds = array<i64: 1, 128>}, {transform_indices = @transform_6, window_bounds = array<i64: 16, 128>}]} {
    %c0 = arith.constant 0 : index
    %c0_0 = arith.constant 0 : index
    %0 = vector.load %arg1[%c0, %c0_0] : memref<16x48xbf16, #tpu.memory_space<vmem>>, vector<16x48xbf16>
    %c0_1 = arith.constant 0 : index
    %c0_2 = arith.constant 0 : index
    %1 = vector.load %arg2[%c0_1, %c0_2] : memref<48x256xbf16, #tpu.memory_space<vmem>>, vector<48x256xbf16>
    %cst = arith.constant dense<0.000000e+00> : vector<16x256xf32>
    %2 = tpu.matmul %0, %1, %cst {dimension_numbers = #tpu.dot_dimension_numbers<[1], [0], [0], [1], [0, 0, 1, 1], [], []>} : vector<16x48xbf16>, vector<48x256xbf16>, vector<16x256xf32> -> vector<16x256xf32>
    %c0_3 = arith.constant 0 : index
    %c0_4 = arith.constant 0 : index
    %3 = vector.load %arg3[%c0_3, %c0_4] : memref<1x256xf32, #tpu.memory_space<vmem>>, vector<1x256xf32>
    %4 = vector.broadcast %3 : vector<1x256xf32> to vector<16x256xf32>
    %5 = arith.addf %2, %4 : vector<16x256xf32>
    %cst_5 = arith.constant 0.000000e+00 : f32
    %6 = vector.broadcast %cst_5 : f32 to vector<16x256xf32>
    %7 = arith.maximumf %5, %6 : vector<16x256xf32>
    %8 = arith.truncf %7 : vector<16x256xf32> to vector<16x256xbf16>
    %c0_6 = arith.constant 0 : index
    %c0_7 = arith.constant 0 : index
    %9 = vector.load %arg4[%c0_6, %c0_7] : memref<256x128xbf16, #tpu.memory_space<vmem>>, vector<256x128xbf16>
    %cst_8 = arith.constant dense<0.000000e+00> : vector<16x128xf32>
    %10 = tpu.matmul %8, %9, %cst_8 {dimension_numbers = #tpu.dot_dimension_numbers<[1], [0], [0], [1], [0, 0, 1, 1], [], []>} : vector<16x256xbf16>, vector<256x128xbf16>, vector<16x128xf32> -> vector<16x128xf32>
    %c0_9 = arith.constant 0 : index
    %c0_10 = arith.constant 0 : index
    %11 = vector.load %arg5[%c0_9, %c0_10] : memref<1x128xf32, #tpu.memory_space<vmem>>, vector<1x128xf32>
    %12 = vector.broadcast %11 : vector<1x128xf32> to vector<16x128xf32>
    %13 = arith.addf %10, %12 : vector<16x128xf32>
    %c0_11 = arith.constant 0 : index
    %c0_12 = arith.constant 0 : index
    %14 = vector.load %arg6[%c0_11, %c0_12] : memref<1x128xi32, #tpu.memory_space<vmem>>, vector<1x128xi32>
    %c0_i32 = arith.constant 0 : i32
    %15 = vector.broadcast %c0_i32 : i32 to vector<1x128xi32>
    %16 = arith.cmpi ne, %14, %15 : vector<1x128xi32>
    %17 = math.exp %13 : vector<16x128xf32>
    %18 = vector.shape_cast %16 : vector<1x128xi1> to vector<1x128xi1>
    %19 = vector.broadcast %18 : vector<1x128xi1> to vector<16x128xi1>
    %20 = arith.select %19, %13, %17 : vector<16x128xi1>, vector<16x128xf32>
    %c0_13 = arith.constant 0 : index
    %c0_14 = arith.constant 0 : index
    %21 = vector.load %arg7[%c0_13, %c0_14] : memref<16x128xf32, #tpu.memory_space<vmem>>, vector<16x128xf32>
    tpu.vector_store %arg7[%c0_13, %c0_14], %20 {strides = array<i32>} : memref<16x128xf32, #tpu.memory_space<vmem>>, vector<16x128xf32>,
    return
  }
  func.func @transform_0(%arg0: i32) -> (i32, i32) {
    %c0_i32 = arith.constant 0 : i32
    %c0_i32_0 = arith.constant 0 : i32
    return %arg0, %c0_i32 : i32, i32
  }
  func.func @transform_1(%arg0: i32) -> (i32, i32) {
    %c0_i32 = arith.constant 0 : i32
    %c0_i32_0 = arith.constant 0 : i32
    %c0_i32_1 = arith.constant 0 : i32
    return %c0_i32, %c0_i32_0 : i32, i32
  }
  func.func @transform_2(%arg0: i32) -> (i32, i32) {
    %c0_i32 = arith.constant 0 : i32
    %c0_i32_0 = arith.constant 0 : i32
    %c0_i32_1 = arith.constant 0 : i32
    return %c0_i32, %c0_i32_0 : i32, i32
  }
  func.func @transform_3(%arg0: i32) -> (i32, i32) {
    %c0_i32 = arith.constant 0 : i32
    %c0_i32_0 = arith.constant 0 : i32
    %c0_i32_1 = arith.constant 0 : i32
    return %c0_i32, %c0_i32_0 : i32, i32
  }
  func.func @transform_4(%arg0: i32) -> (i32, i32) {
    %c0_i32 = arith.constant 0 : i32
    %c0_i32_0 = arith.constant 0 : i32
    %c0_i32_1 = arith.constant 0 : i32
    return %c0_i32, %c0_i32_0 : i32, i32
  }
  func.func @transform_5(%arg0: i32) -> (i32, i32) {
    %c0_i32 = arith.constant 0 : i32
    %c0_i32_0 = arith.constant 0 : i32
    %c0_i32_1 = arith.constant 0 : i32
    return %c0_i32, %c0_i32_0 : i32, i32
  }
  func.func @transform_6(%arg0: i32) -> (i32, i32) {
    %c0_i32 = arith.constant 0 : i32
    %c0_i32_0 = arith.constant 0 : i32
    return %arg0, %c0_i32 : i32, i32
  }
}

module attributes {stable_mosaic.version = 11 : i64} {
  func.func @encoder_kernel_resident(%arg0: i32, %arg1: memref<16x48xbf16, #tpu.memory_space<vmem>>, %arg2: memref<48x256xbf16, #tpu.memory_space<vmem>>, %arg3: memref<1x256xf32, #tpu.memory_space<vmem>>, %arg4: memref<256x128xbf16, #tpu.memory_space<vmem>>, %arg5: memref<1x128xf32, #tpu.memory_space<vmem>>, %arg6: memref<1x128xi32, #tpu.memory_space<vmem>>, %arg7: memref<16x128xf32, #tpu.memory_space<vmem>>) attributes {dimension_semantics = [#tpu.dimension_semantics<parallel>], iteration_bounds = array<i64: 2>, scalar_prefetch = 0 : i64, scratch_operands = 0 : i64, tpu.core_type = #tpu.core_type<tc>, window_params = [{transform_indices = @transform_0, window_bounds = array<i64: 16, 48>}, {pipeline_mode = #tpu.pipeline_mode<synchronous>, transform_indices = @transform_1, window_bounds = array<i64: 48, 256>}, {pipeline_mode = #tpu.pipeline_mode<synchronous>, transform_indices = @transform_2, window_bounds = array<i64: 1, 256>}, {pipeline_mode = #tpu.pipeline_mode<synchronous>, transform_indices = @transform_3, window_bounds = array<i64: 256, 128>}, {pipeline_mode = #tpu.pipeline_mode<synchronous>, transform_indices = @transform_4, window_bounds = array<i64: 1, 128>}, {pipeline_mode = #tpu.pipeline_mode<synchronous>, transform_indices = @transform_5, window_bounds = array<i64: 1, 128>}, {transform_indices = @transform_6, window_bounds = array<i64: 16, 128>}]} {
    %c0 = arith.constant 0 : index
    %c0_0 = arith.constant 0 : index
    %0 = vector.load %arg1[%c0, %c0_0] : memref<16x48xbf16, #tpu.memory_space<vmem>>, vector<16x48xbf16>
    %c0_1 = arith.constant 0 : index
    %c0_2 = arith.constant 0 : index
    %1 = vector.load %arg2[%c0_1, %c0_2] : memref<48x256xbf16, #tpu.memory_space<vmem>>, vector<48x256xbf16>
    %cst = arith.constant dense<0.000000e+00> : vector<16x256xf32>
    %2 = tpu.matmul %0, %1, %cst {dimension_numbers = #tpu.dot_dimension_numbers<[1], [0], [0], [1], [0, 0, 1, 1], [], []>} : vector<16x48xbf16>, vector<48x256xbf16>, vector<16x256xf32> -> vector<16x256xf32>
    %c0_3 = arith.constant 0 : index
    %c0_4 = arith.constant 0 : index
    %3 = vector.load %arg3[%c0_3, %c0_4] : memref<1x256xf32, #tpu.memory_space<vmem>>, vector<1x256xf32>
    %4 = vector.broadcast %3 : vector<1x256xf32> to vector<16x256xf32>
    %5 = arith.addf %2, %4 : vector<16x256xf32>
    %cst_5 = arith.constant 0.000000e+00 : f32
    %6 = vector.broadcast %cst_5 : f32 to vector<16x256xf32>
    %7 = arith.maximumf %5, %6 : vector<16x256xf32>
    %8 = arith.truncf %7 : vector<16x256xf32> to vector<16x256xbf16>
    %c0_6 = arith.constant 0 : index
    %c0_7 = arith.constant 0 : index
    %9 = vector.load %arg4[%c0_6, %c0_7] : memref<256x128xbf16, #tpu.memory_space<vmem>>, vector<256x128xbf16>
    %cst_8 = arith.constant dense<0.000000e+00> : vector<16x128xf32>
    %10 = tpu.matmul %8, %9, %cst_8 {dimension_numbers = #tpu.dot_dimension_numbers<[1], [0], [0], [1], [0, 0, 1, 1], [], []>} : vector<16x256xbf16>, vector<256x128xbf16>, vector<16x128xf32> -> vector<16x128xf32>
    %c0_9 = arith.constant 0 : index
    %c0_10 = arith.constant 0 : index
    %11 = vector.load %arg5[%c0_9, %c0_10] : memref<1x128xf32, #tpu.memory_space<vmem>>, vector<1x128xf32>
    %12 = vector.broadcast %11 : vector<1x128xf32> to vector<16x128xf32>
    %13 = arith.addf %10, %12 : vector<16x128xf32>
    %c0_11 = arith.constant 0 : index
    %c0_12 = arith.constant 0 : index
    %14 = vector.load %arg6[%c0_11, %c0_12] : memref<1x128xi32, #tpu.memory_space<vmem>>, vector<1x128xi32>
    %c0_i32 = arith.constant 0 : i32
    %15 = vector.broadcast %c0_i32 : i32 to vector<1x128xi32>
    %16 = arith.cmpi ne, %14, %15 : vector<1x128xi32>
    %17 = math.exp %13 : vector<16x128xf32>
    %18 = vector.shape_cast %16 : vector<1x128xi1> to vector<1x128xi1>
    %19 = vector.broadcast %18 : vector<1x128xi1> to vector<16x128xi1>
    %20 = arith.select %19, %13, %17 : vector<16x128xi1>, vector<16x128xf32>
    %c0_13 = arith.constant 0 : index
    %c0_14 = arith.constant 0 : index
    %21 = vector.load %arg7[%c0_13, %c0_14] : memref<16x128xf32, #tpu.memory_space<vmem>>, vector<16x128xf32>
    tpu.vector_store %arg7[%c0_13, %c0_14], %20 {strides = array<i32>} : memref<16x128xf32, #tpu.memory_space<vmem>>, vector<16x128xf32>,
    return
  }
  func.func @transform_0(%arg0: i32) -> (i32, i32) {
    %c0_i32 = arith.constant 0 : i32
    %c0_i32_0 = arith.constant 0 : i32
    return %arg0, %c0_i32 : i32, i32
  }
  func.func @transform_1(%arg0: i32) -> (i32, i32) {
    %c0_i32 = arith.constant 0 : i32
    %c0_i32_0 = arith.constant 0 : i32
    %c0_i32_1 = arith.constant 0 : i32
    return %c0_i32, %c0_i32_0 : i32, i32
  }
  func.func @transform_2(%arg0: i32) -> (i32, i32) {
    %c0_i32 = arith.constant 0 : i32
    %c0_i32_0 = arith.constant 0 : i32
    %c0_i32_1 = arith.constant 0 : i32
    return %c0_i32, %c0_i32_0 : i32, i32
  }
  func.func @transform_3(%arg0: i32) -> (i32, i32) {
    %c0_i32 = arith.constant 0 : i32
    %c0_i32_0 = arith.constant 0 : i32
    %c0_i32_1 = arith.constant 0 : i32
    return %c0_i32, %c0_i32_0 : i32, i32
  }
  func.func @transform_4(%arg0: i32) -> (i32, i32) {
    %c0_i32 = arith.constant 0 : i32
    %c0_i32_0 = arith.constant 0 : i32
    %c0_i32_1 = arith.constant 0 : i32
    return %c0_i32, %c0_i32_0 : i32, i32
  }
  func.func @transform_5(%arg0: i32) -> (i32, i32) {
    %c0_i32 = arith.constant 0 : i32
    %c0_i32_0 = arith.constant 0 : i32
    %c0_i32_1 = arith.constant 0 : i32
    return %c0_i32, %c0_i32_0 : i32, i32
  }
  func.func @transform_6(%arg0: i32) -> (i32, i32) {
    %c0_i32 = arith.constant 0 : i32
    %c0_i32_0 = arith.constant 0 : i32
    return %arg0, %c0_i32 : i32, i32
  }
}

</mosaic_0001>

<llo_original>
// kernel: tpu_custom_call.1
$region0: #{tpu_custom_call.1}
  #allocation0 [shape = 'u32[]', space=smem, size = 0x4, offset = 0x4, fixed_abs, tag = 'smem constant byte address 0x4 - core index']
  #allocation1 [shape = 'u32[72,128]{1,0:T(1,128)}', space=vmem, size = 0x9000, scoped, tag = 'internal scratch']
  %s0 = inlined_call_operand.hbm [shape: bf16[32,48], index: 0, kind: input, shape index: {}]
  %s1 = inlined_call_operand.hbm [shape: bf16[48,256], index: 1, kind: input, shape index: {}]
  %s2 = inlined_call_operand.hbm [shape: f32[1,256], index: 2, kind: input, shape index: {}]
  %s3 = inlined_call_operand.hbm [shape: bf16[256,128], index: 3, kind: input, shape index: {}]
  %s4 = inlined_call_operand.vmem [shape: f32[1,128], index: 4, kind: input, shape index: {}]
  %s5 = inlined_call_operand.vmem [shape: s32[1,128], index: 5, kind: input, shape index: {}]
  %s6 = inlined_call_operand.hbm [shape: f32[32,128], index: 6, kind: output, shape index: {}]
  %s7 = sld [smem:[#allocation0]]
  $region73: #{tpu_custom_call.1} parent=0
    _
  %s9 = ssub.s32 1, %s7
  %s10 = scalar_select 0, %s9, %s7
  $region1: #{tpu_custom_call.1} parent=0
    #allocation2 [shape = 'u8[8192]{0}', space=vmem, size = 0x2000, scoped, tag = 'input window, operand 0']
    #allocation3 [shape = 's32[2]{0}', space=sflag, size = 0x8, scoped, tag = 'scoped memory for tpu_custom_call.1']
    #allocation4 [shape = 's32[2]{0}', space=sflag, size = 0x8, scoped, tag = 'scoped memory for tpu_custom_call.1']
    #allocation5 [shape = 'u8[24576]{0}', space=vmem, size = 0x6000, scoped, tag = 'input window, operand 1, single buffered']
    #allocation6 [shape = 's32[1]{0}', space=sflag, size = 0x4, scoped, tag = 'scoped memory for tpu_custom_call.1']
    #allocation7 [shape = 'u8[1024]{0}', space=vmem, size = 0x400, scoped, tag = 'input window, operand 2, single buffered']
    #allocation8 [shape = 'u8[65536]{0}', space=vmem, size = 0x10000, scoped, tag = 'input window, operand 3, single buffered']
    #allocation9 [shape = 's32[1]{0}', space=sflag, size = 0x4, scoped, tag = 'scoped memory for tpu_custom_call.1']
    #allocation10 [shape = 'u8[16384]{0}', space=vmem, size = 0x4000, scoped, tag = 'output window, operand 0']
    %11 = vsyncpa [#allocation3], 0
    %s12 = scalar_lea.sflag [#allocation3], 1
    %13 = vsyncpa %s12, 0
    %14 = vsyncpa [#allocation6], 0
    %15 = vsyncpa [#allocation9], 0
    %16 = vsyncpa [#allocation4], 0
    %s17 = scalar_lea.sflag [#allocation4], 1
    %18 = vsyncpa %s17, 0
    loop: start=0, step=1, limit=4
    $region2: #{tpu_custom_call.1} parent=1 // loop_pre_header
      _
    $region3: #{tpu_custom_call.1} parent=1 // loop_header
      %s20 = sphi 0, %s24
      %p21 = scmp.ge.s32.totalorder %s20, 4
      %s30 = sphi 0, %s32
      %s33 = sphi 0, %s30
      %s34 = sphi 0, %s33
      %s50 = sphi 0, %s34
      %s54 = sphi 0, %s54
      %s56 = sphi 0, %s54
      %s57 = sphi 0, %s56
      %s71 = sphi 0, %s57
      %s75 = sphi 0, %s75
      %s77 = sphi 0, %s75
      %s78 = sphi 0, %s77
      %s92 = sphi 0, %s78
      %s96 = sphi 0, %s96
      %s98 = sphi 0, %s96
      %s99 = sphi 0, %s98
      %s113 = sphi 0, %s99
      %s117 = sphi 0, %s117
      %s119 = sphi 0, %s117
      %s120 = sphi 0, %s119
      %s134 = sphi 0, %s120
      %s138 = sphi 0, %s138
      %s140 = sphi 0, %s138
      %s141 = sphi 0, %s140
      %s155 = sphi 0, %s141
      %s161 = sphi 0, %s163
      %s164 = sphi 0, %s161
      %s165 = sphi 0, %s164
      %s181 = sphi 0, %s165
    $region4: #{tpu_custom_call.1} parent=1 // loop_header_branch
      %23 = sbr.rel (%p21) target = $region8
    $region5: #{tpu_custom_call.1} parent=1 // loop_body
      %s25 = ssub.s32 %s20, 1
      %s26 = ssub.s32 %s20, 2
      %s27 = sadd.s32 %s20, 1
      %s28 = ssub.s32 %s20, %s27
      %p29 = scmp.eq.s32.totalorder %s28, 0
      %s31 = sadd.s32 %s30, 1
      %s32 = scalar_select %p29, %s30, %s31
      %p35 = pneg %p29
      %p36 = scmp.eq.s32.totalorder %s20, 1
      %p37 = por %p35, %p36
      %p38 = scmp.ne.s32.totalorder %s30, %s33
      %p39 = scmp.eq.s32.totalorder %s20, 0
      %p40 = por %p38, %p39
      %p41 = scmp.ne.s32.totalorder %s30, %s33
      %p42 = scmp.eq.s32.totalorder %s25, 1
      %p43 = por %p41, %p42
      %p44 = scmp.ne.s32.totalorder %s33, %s34
      %p45 = scmp.eq.s32.totalorder %s25, 0
      %p46 = por %p44, %p45
      %p47 = scmp.ne.s32.totalorder %s33, %s34
      %p48 = scmp.eq.s32.totalorder %s26, 1
      %p49 = por %p47, %p48
      %p51 = scmp.ne.s32.totalorder %s34, %s50
      %p52 = scmp.eq.s32.totalorder %s26, 0
      %p53 = por %p51, %p52
      %s55 = sadd.s32 %s54, 1
      %p58 = scmp.eq.s32.totalorder %s20, 1
      %p59 = scmp.ne.s32.totalorder %s54, %s56
      %p60 = scmp.eq.s32.totalorder %s20, 0
      %p61 = por %p59, %p60
      %p62 = scmp.ne.s32.totalorder %s54, %s56
      %p63 = scmp.eq.s32.totalorder %s25, 1
      %p64 = por %p62, %p63
      %p65 = scmp.ne.s32.totalorder %s56, %s57
      %p66 = scmp.eq.s32.totalorder %s25, 0
      %p67 = por %p65, %p66
      %p68 = scmp.ne.s32.totalorder %s56, %s57
      %p69 = scmp.eq.s32.totalorder %s26, 1
      %p70 = por %p68, %p69
      %p72 = scmp.ne.s32.totalorder %s57, %s71
      %p73 = scmp.eq.s32.totalorder %s26, 0
      %p74 = por %p72, %p73
      %s76 = sadd.s32 %s75, 1
      %p79 = scmp.eq.s32.totalorder %s20, 1
      %p80 = scmp.ne.s32.totalorder %s75, %s77
      %p81 = scmp.eq.s32.totalorder %s20, 0
      %p82 = por %p80, %p81
      %p83 = scmp.ne.s32.totalorder %s75, %s77
      %p84 = scmp.eq.s32.totalorder %s25, 1
      %p85 = por %p83, %p84
      %p86 = scmp.ne.s32.totalorder %s77, %s78
      %p87 = scmp.eq.s32.totalorder %s25, 0
      %p88 = por %p86, %p87
      %p89 = scmp.ne.s32.totalorder %s77, %s78
      %p90 = scmp.eq.s32.totalorder %s26, 1
      %p91 = por %p89, %p90
      %p93 = scmp.ne.s32.totalorder %s78, %s92
      %p94 = scmp.eq.s32.totalorder %s26, 0
      %p95 = por %p93, %p94
      %s97 = sadd.s32 %s96, 1
      %p100 = scmp.eq.s32.totalorder %s20, 1
      %p101 = scmp.ne.s32.totalorder %s96, %s98
      %p102 = scmp.eq.s32.totalorder %s20, 0
      %p103 = por %p101, %p102
      %p104 = scmp.ne.s32.totalorder %s96, %s98
      %p105 = scmp.eq.s32.totalorder %s25, 1
      %p106 = por %p104, %p105
      %p107 = scmp.ne.s32.totalorder %s98, %s99
      %p108 = scmp.eq.s32.totalorder %s25, 0
      %p109 = por %p107, %p108
      %p110 = scmp.ne.s32.totalorder %s98, %s99
      %p111 = scmp.eq.s32.totalorder %s26, 1
      %p112 = por %p110, %p111
      %p114 = scmp.ne.s32.totalorder %s99, %s113
      %p115 = scmp.eq.s32.totalorder %s26, 0
      %p116 = por %p114, %p115
      %s118 = sadd.s32 %s117, 1
      %p121 = scmp.eq.s32.totalorder %s20, 1
      %p122 = scmp.ne.s32.totalorder %s117, %s119
      %p123 = scmp.eq.s32.totalorder %s20, 0
      %p124 = por %p122, %p123
      %p125 = scmp.ne.s32.totalorder %s117, %s119
      %p126 = scmp.eq.s32.totalorder %s25, 1
      %p127 = por %p125, %p126
      %p128 = scmp.ne.s32.totalorder %s119, %s120
      %p129 = scmp.eq.s32.totalorder %s25, 0
      %p130 = por %p128, %p129
      %p131 = scmp.ne.s32.totalorder %s119, %s120
      %p132 = scmp.eq.s32.totalorder %s26, 1
      %p133 = por %p131, %p132
      %p135 = scmp.ne.s32.totalorder %s120, %s134
      %p136 = scmp.eq.s32.totalorder %s26, 0
      %p137 = por %p135, %p136
      %s139 = sadd.s32 %s138, 1
      %p142 = scmp.eq.s32.totalorder %s20, 1
      %p143 = scmp.ne.s32.totalorder %s138, %s140
      %p144 = scmp.eq.s32.totalorder %s20, 0
      %p145 = por %p143, %p144
      %p146 = scmp.ne.s32.totalorder %s138, %s140
      %p147 = scmp.eq.s32.totalorder %s25, 1
      %p148 = por %p146, %p147
      %p149 = scmp.ne.s32.totalorder %s140, %s141
      %p150 = scmp.eq.s32.totalorder %s25, 0
      %p151 = por %p149, %p150
      %p152 = scmp.ne.s32.totalorder %s140, %s141
      %p153 = scmp.eq.s32.totalorder %s26, 1
      %p154 = por %p152, %p153
      %p156 = scmp.ne.s32.totalorder %s141, %s155
      %p157 = scmp.eq.s32.totalorder %s26, 0
      %p158 = por %p156, %p157
      %s159 = ssub.s32 %s20, %s27
      %p160 = scmp.eq.s32.totalorder %s159, 0
      %s162 = sadd.s32 %s161, 1
      %s163 = scalar_select %p160, %s161, %s162
      %p166 = pneg %p160
      %p167 = scmp.eq.s32.totalorder %s20, 1
      %p168 = por %p166, %p167
      %p169 = scmp.ne.s32.totalorder %s161, %s164
      %p170 = scmp.eq.s32.totalorder %s20, 0
      %p171 = por %p169, %p170
      %p172 = scmp.ne.s32.totalorder %s161, %s164
      %p173 = scmp.eq.s32.totalorder %s25, 1
      %p174 = por %p172, %p173
      %p175 = scmp.ne.s32.totalorder %s164, %s165
      %p176 = scmp.eq.s32.totalorder %s25, 0
      %p177 = por %p175, %p176
      %p178 = scmp.ne.s32.totalorder %s164, %s165
      %p179 = scmp.eq.s32.totalorder %s26, 1
      %p180 = por %p178, %p179
      %p182 = scmp.ne.s32.totalorder %s165, %s181
      %p183 = scmp.eq.s32.totalorder %s26, 0
      %p184 = por %p182, %p183
      %p185 = scmp.le.s32.totalorder 1, %s20
      %p186 = scmp.lt.s32.totalorder %s20, 3
      %p187 = pnand %p185, %p186
      %p188 = pneg %p187
      // Predicated region
      $region9: #{tpu_custom_call.1} parent=5 // pred_check
        _
      $region10: #{tpu_custom_call.1} parent=5 // pred_check_branch
        %190 = sbr.rel (%p187) target = $region12
      $region11: #{tpu_custom_call.1} parent=5 // pred_region
        %s191 = ssub.s32 %s20, 1
        // Predicated region
        $region13: #{tpu_custom_call.1} parent=11 // pred_check
          %p192 = pneg %p67
        $region14: #{tpu_custom_call.1} parent=11 // pred_check_branch
          %194 = sbr.rel (%p192) target = $region16
        $region15: #{tpu_custom_call.1} parent=11 // pred_region
          %196 = vsyncadd [#allocation6], 0
          %s197 = sshll.u32 %s1, 4
          %s198 = int_to_ptr.hbm [resolvable:$true] %s197
          %s199 = sshll.u32 [#allocation5], 4
          %s200 = int_to_ptr.vmem [resolvable:$true] %s199
          %205 = dma.hbm_to_vmem [thread:$0]  %s198, 768, %s200, [#allocation6], 128, 128, 8
        $region16: #{tpu_custom_call.1} parent=11 // pred_fallthru
          _
        // Predicated region
        $region17: #{tpu_custom_call.1} parent=11 // pred_check
          %p206 = pneg %p88
        $region18: #{tpu_custom_call.1} parent=11 // pred_check_branch
          %208 = sbr.rel (%p206) target = $region20
        $region19: #{tpu_custom_call.1} parent=11 // pred_region
          %210 = vsyncadd [#allocation6], 0
          %s212 = sshll.u32 %s2, 4
          %s213 = int_to_ptr.hbm [resolvable:$true] %s212
          %s214 = sshll.u32 [#allocation7], 4
          %s215 = int_to_ptr.vmem [resolvable:$true] %s214
          %217 = dma.hbm_to_vmem [thread:$0]  %s213, 32, %s215, [#allocation6]
        $region20: #{tpu_custom_call.1} parent=11 // pred_fallthru
          _
        // Predicated region
        $region21: #{tpu_custom_call.1} parent=11 // pred_check
          %p218 = pneg %p109
        $region22: #{tpu_custom_call.1} parent=11 // pred_check_branch
          %220 = sbr.rel (%p218) target = $region24
        $region23: #{tpu_custom_call.1} parent=11 // pred_region
          %222 = vsyncadd [#allocation9], 0
          %s223 = sshll.u32 %s3, 4
          %s224 = int_to_ptr.hbm [resolvable:$true] %s223
          %s225 = sshll.u32 [#allocation8], 4
          %s226 = int_to_ptr.vmem [resolvable:$true] %s225
          %231 = dma.hbm_to_vmem [thread:$0]  %s224, 2048, %s226, [#allocation9], 64, 64, 4
        $region24: #{tpu_custom_call.1} parent=11 // pred_fallthru
          _
        // Predicated region
        $region25: #{tpu_custom_call.1} parent=11 // pred_check
          %p232 = pneg %p130
        $region26: #{tpu_custom_call.1} parent=11 // pred_check_branch
          %234 = sbr.rel (%p232) target = $region28
        $region27: #{tpu_custom_call.1} parent=11 // pred_region
          _
        $region28: #{tpu_custom_call.1} parent=11 // pred_fallthru
          _
        // Predicated region
        $region29: #{tpu_custom_call.1} parent=11 // pred_check
          %p235 = pneg %p151
        $region30: #{tpu_custom_call.1} parent=11 // pred_check_branch
          %237 = sbr.rel (%p235) target = $region32
        $region31: #{tpu_custom_call.1} parent=11 // pred_region
          _
        $region32: #{tpu_custom_call.1} parent=11 // pred_fallthru
          _
      $region12: #{tpu_custom_call.1} parent=5 // pred_fallthru
        _
      %p238 = scmp.lt.s32.totalorder %s20, 2
      // Predicated region
      $region33: #{tpu_custom_call.1} parent=5 // pred_check
        %p239 = pneg %p238
      $region34: #{tpu_custom_call.1} parent=5 // pred_check_branch
        %241 = sbr.rel (%p239) target = $region36
      $region35: #{tpu_custom_call.1} parent=5 // pred_region
        // Predicated region
        $region37: #{tpu_custom_call.1} parent=35 // pred_check
          %p242 = pneg %p40
        $region38: #{tpu_custom_call.1} parent=35 // pred_check_branch
          %244 = sbr.rel (%p242) target = $region40
        $region39: #{tpu_custom_call.1} parent=35 // pred_region
          %s245 = sand.u32 %s30, 1
          %s246 = scalar_lea.sflag [#allocation3], %s245
          %s247 = sand.u32 %s30, 1
          %s248 = smul.addr %s247, 8
          %s249 = scalar_lea.vmem [#allocation2], %s248
          %s250 = smul.u32 2, %s20
          %252 = vsyncadd %s246, 0
          %s253 = smul.addr %s250, 4
          %s254 = scalar_lea.hbm %s0, %s253
          %s255 = sshll.u32 %s254, 4
          %s256 = int_to_ptr.hbm [resolvable:$true] %s255
          %s257 = sshll.u32 %s249, 4
          %s258 = int_to_ptr.vmem [resolvable:$true] %s257
          %263 = dma.hbm_to_vmem [thread:$0]  %s256, 128, %s258, %s246, 64, 64, 4
        $region40: #{tpu_custom_call.1} parent=35 // pred_fallthru
          _
      $region36: #{tpu_custom_call.1} parent=5 // pred_fallthru
        _
      %p264 = scmp.le.s32.totalorder 1, %s20
      %p265 = scmp.lt.s32.totalorder %s20, 3
      %p266 = pnand %p264, %p265
      %p267 = pneg %p266
      // Predicated region
      $region41: #{tpu_custom_call.1} parent=5 // pred_check
        _
      $region42: #{tpu_custom_call.1} parent=5 // pred_check_branch
        %269 = sbr.rel (%p266) target = $region44
      $region43: #{tpu_custom_call.1} parent=5 // pred_region
        %s270 = ssub.s32 %s20, 1
        %s271 = sand.u32 %s33, 1
        %s272 = scalar_lea.sflag [#allocation3], %s271
        %s273 = sand.u32 %s33, 1
        %s274 = smul.addr %s273, 8
        %s275 = scalar_lea.vmem [#allocation2], %s274
        // Predicated region
        $region45: #{tpu_custom_call.1} parent=43 // pred_check
          %p276 = pneg %p46
        $region46: #{tpu_custom_call.1} parent=43 // pred_check_branch
          %278 = sbr.rel (%p276) target = $region48
        $region47: #{tpu_custom_call.1} parent=43 // pred_region
          %280 = dma.done %s272, 128
        $region48: #{tpu_custom_call.1} parent=43 // pred_fallthru
          _
        // Predicated region
        $region49: #{tpu_custom_call.1} parent=43 // pred_check
          %p281 = pneg %p67
        $region50: #{tpu_custom_call.1} parent=43 // pred_check_branch
          %283 = sbr.rel (%p281) target = $region52
        $region51: #{tpu_custom_call.1} parent=43 // pred_region
          %285 = dma.done [#allocation6], 768
        $region52: #{tpu_custom_call.1} parent=43 // pred_fallthru
          _
        // Predicated region
        $region53: #{tpu_custom_call.1} parent=43 // pred_check
          %p286 = pneg %p88
        $region54: #{tpu_custom_call.1} parent=43 // pred_check_branch
          %288 = sbr.rel (%p286) target = $region56
        $region55: #{tpu_custom_call.1} parent=43 // pred_region
          %290 = dma.done [#allocation6], 32
        $region56: #{tpu_custom_call.1} parent=43 // pred_fallthru
          _
        // Predicated region
        $region57: #{tpu_custom_call.1} parent=43 // pred_check
          %p291 = pneg %p109
        $region58: #{tpu_custom_call.1} parent=43 // pred_check_branch
          %293 = sbr.rel (%p291) target = $region60
        $region59: #{tpu_custom_call.1} parent=43 // pred_region
          %295 = dma.done [#allocation9], 2048
        $region60: #{tpu_custom_call.1} parent=43 // pred_fallthru
          _
        %s296 = sand.u32 %s33, 1
        %s297 = scalar_lea.sflag [#allocation3], %s296
        %s298 = sand.u32 %s33, 1
        %s299 = smul.addr %s298, 8
        %s300 = scalar_lea.vmem [#allocation2], %s299
        %p301 = pneg %p46
        %p302 = pneg %p43
        %p303 = pneg %p67
        %p304 = pneg %p64
        %p305 = pneg %p88
        %p306 = pneg %p85
        %p307 = pneg %p109
        %p308 = pneg %p106
        %p309 = pneg %p130
        %p310 = pneg %p127
        %p311 = pneg %p151
        %p312 = pneg %p148
        %p313 = pneg %p177
        %p314 = pneg %p174
        %s315 = sand.u32 %s164, 1
        %s316 = scalar_lea.sflag [#allocation4], %s315
        %s317 = sand.u32 %s164, 1
        %s318 = smul.addr %s317, 16
        %s319 = scalar_lea.vmem [#allocation10], %s318
        %s320 = smul.u32 2, %s25
        %s321 = smul.u32 2, %s25
        %v323 = vld [vmem:[%s275] sm:$0xf]
        %v324 = vld [vmem:[%s275 + $0x4] sm:$0xf]
        %v325 = vld [vmem:[#allocation5] sm:$0xff]
        %v326 = vld [vmem:[#allocation5 + $0x8] sm:$0xff]
        %v327 = vld [vmem:[#allocation5 + $0x10] sm:$0xff]
        %v328 = vld [vmem:[#allocation5 + $0x18] sm:$0xff]
        %v329 = vld [vmem:[#allocation5 + $0x20] sm:$0xff]
        %v330 = vld [vmem:[#allocation5 + $0x28] sm:$0xff]
        %v331 = vld [vmem:[#allocation7] sm:$0x3]
        %v333 = vperm.slane %v331, 0
        %v334 = vperm.slane %v331, 1
        %v339 = vunpack.c.l.b16 %v323
        %v340 = vunpack.c.l.b16 %v324
        %v341 = vpack.c.b16 %v340, %v339
        %v348 = vunpack.c.l.b16 %v325
        %v349 = vunpack.c.h.b16 %v325
        %v350 = vunpack.c.l.b16 %v326
        %v351 = vunpack.c.h.b16 %v326
        %v352 = vunpack.c.l.b16 %v327
        %v353 = vunpack.c.h.b16 %v327
        %v354 = vunpack.c.l.b16 %v328
        %v355 = vunpack.c.h.b16 %v328
        %v356 = vunpack.c.l.b16 %v329
        %v357 = vunpack.c.h.b16 %v329
        %v358 = vunpack.c.l.b16 %v330
        %v359 = vunpack.c.h.b16 %v330
        %v360 = vpack.c.b16 %v350, %v348
        %v361 = vpack.c.b16 %v351, %v349
        %v362 = vpack.c.b16 %v354, %v352
        %v363 = vpack.c.b16 %v355, %v353
        %v364 = vpack.c.b16 %v358, %v356
        %v365 = vpack.c.b16 %v359, %v357
        %vm372 = vcmask 392192
        %v374 = vsel %vm372, %v341, 0
        %376 = vmatpush.bf16.msra.mxu0 0
        %377 = vmatpush.bf16.msra.mxu0 0
        %378 = vmatpush.bf16.msra.mxu0 0
        %379 = vmatpush.bf16.msra.mxu0 0
        %380 = vmatpush.bf16.msra.mxu0 0
        %381 = vmatpush.bf16.msra.mxu0 %v364
        %382 = vmatpush.bf16.msra.mxu0 %v362
        %383 = vmatpush.bf16.msra.mxu0 %v360
        %384 = vmatmul.bf16.gmra.mxu0 %v374
        %v385 = vpop.f32.mrf.mxu0
        %v386 = vadd.f32 %v333, %v385
        %v387 = vpop.f32.mrf.mxu0
        %v388 = vadd.f32 %v333, %v387
        %389 = vdwg.mxu0
        %390 = vmatpush.bf16.msra.mxu0 0
        %391 = vmatpush.bf16.msra.mxu0 0
        %392 = vmatpush.bf16.msra.mxu0 0
        %393 = vmatpush.bf16.msra.mxu0 0
        %394 = vmatpush.bf16.msra.mxu0 0
        %395 = vmatpush.bf16.msra.mxu0 %v365
        %396 = vmatpush.bf16.msra.mxu0 %v363
        %397 = vmatpush.bf16.msra.mxu0 %v361
        %398 = vmatmul.bf16.gmra.mxu0 %v374
        %v399 = vpop.f32.mrf.mxu0
        %v400 = vadd.f32 %v334, %v399
        %v401 = vpop.f32.mrf.mxu0
        %v402 = vadd.f32 %v334, %v401
        %403 = vdwg.mxu0
        %v404 = vmax.f32 %v386, 0.0
        %v405 = vmax.f32 %v400, 0.0
        %v406 = vmax.f32 %v388, 0.0
        %v407 = vmax.f32 %v402, 0.0
        %v408 = vpack.c.bf16 %v406, %v404
        %v409 = vpack.c.bf16 %v407, %v405
        %v410 = vld [vmem:[#allocation8] sm:$0xf]
        %v411 = vld [vmem:[#allocation8 + $0x4] sm:$0xf]
        %v412 = vld [vmem:[#allocation8 + $0x8] sm:$0xf]
        %v413 = vld [vmem:[#allocation8 + $0xc] sm:$0xf]
        %v414 = vld [vmem:[#allocation8 + $0x10] sm:$0xf]
        %v415 = vld [vmem:[#allocation8 + $0x14] sm:$0xf]
        %v416 = vld [vmem:[#allocation8 + $0x18] sm:$0xf]
        %v417 = vld [vmem:[#allocation8 + $0x1c] sm:$0xf]
        %v418 = vld [vmem:[#allocation8 + $0x20] sm:$0xf]
        %v419 = vld [vmem:[#allocation8 + $0x24] sm:$0xf]
        %v420 = vld [vmem:[#allocation8 + $0x28] sm:$0xf]
        %v421 = vld [vmem:[#allocation8 + $0x2c] sm:$0xf]
        %v422 = vld [vmem:[#allocation8 + $0x30] sm:$0xf]
        %v423 = vld [vmem:[#allocation8 + $0x34] sm:$0xf]
        %v424 = vld [vmem:[#allocation8 + $0x38] sm:$0xf]
        %v425 = vld [vmem:[#allocation8 + $0x3c] sm:$0xf]
        %v426 = vld [vmem:[#allocation8 + $0x40] sm:$0xf]
        %v427 = vld [vmem:[#allocation8 + $0x44] sm:$0xf]
        %v428 = vld [vmem:[#allocation8 + $0x48] sm:$0xf]
        %v429 = vld [vmem:[#allocation8 + $0x4c] sm:$0xf]
        %v430 = vld [vmem:[#allocation8 + $0x50] sm:$0xf]
        %v431 = vld [vmem:[#allocation8 + $0x54] sm:$0xf]
        %v432 = vld [vmem:[#allocation8 + $0x58] sm:$0xf]
        %v433 = vld [vmem:[#allocation8 + $0x5c] sm:$0xf]
        %v434 = vld [vmem:[#allocation8 + $0x60] sm:$0xf]
        %v435 = vld [vmem:[#allocation8 + $0x64] sm:$0xf]
        %v436 = vld [vmem:[#allocation8 + $0x68] sm:$0xf]
        %v437 = vld [vmem:[#allocation8 + $0x6c] sm:$0xf]
        %v438 = vld [vmem:[#allocation8 + $0x70] sm:$0xf]
        %v439 = vld [vmem:[#allocation8 + $0x74] sm:$0xf]
        %v440 = vld [vmem:[#allocation8 + $0x78] sm:$0xf]
        %v441 = vld [vmem:[#allocation8 + $0x7c] sm:$0xf]
        %v442 = vld [vmem:[%s4] sm:$0x1]
        %v444 = vperm.slane %v442, 0
        %v478 = vunpack.c.l.b16 %v410
        %v479 = vunpack.c.l.b16 %v411
        %v480 = vunpack.c.l.b16 %v412
        %v481 = vunpack.c.l.b16 %v413
        %v482 = vunpack.c.l.b16 %v414
        %v483 = vunpack.c.l.b16 %v415
        %v484 = vunpack.c.l.b16 %v416
        %v485 = vunpack.c.l.b16 %v417
        %v486 = vunpack.c.l.b16 %v418
        %v487 = vunpack.c.l.b16 %v419
        %v488 = vunpack.c.l.b16 %v420
        %v489 = vunpack.c.l.b16 %v421
        %v490 = vunpack.c.l.b16 %v422
        %v491 = vunpack.c.l.b16 %v423
        %v492 = vunpack.c.l.b16 %v424
        %v493 = vunpack.c.l.b16 %v425
        %v494 = vunpack.c.l.b16 %v426
        %v495 = vunpack.c.l.b16 %v427
        %v496 = vunpack.c.l.b16 %v428
        %v497 = vunpack.c.l.b16 %v429
        %v498 = vunpack.c.l.b16 %v430
        %v499 = vunpack.c.l.b16 %v431
        %v500 = vunpack.c.l.b16 %v432
        %v501 = vunpack.c.l.b16 %v433
        %v502 = vunpack.c.l.b16 %v434
        %v503 = vunpack.c.l.b16 %v435
        %v504 = vunpack.c.l.b16 %v436
        %v505 = vunpack.c.l.b16 %v437
        %v506 = vunpack.c.l.b16 %v438
        %v507 = vunpack.c.l.b16 %v439
        %v508 = vunpack.c.l.b16 %v440
        %v509 = vunpack.c.l.b16 %v441
        %v510 = vpack.c.b16 %v479, %v478
        %v511 = vpack.c.b16 %v481, %v480
        %v512 = vpack.c.b16 %v483, %v482
        %v513 = vpack.c.b16 %v485, %v484
        %v514 = vpack.c.b16 %v487, %v486
        %v515 = vpack.c.b16 %v489, %v488
        %v516 = vpack.c.b16 %v491, %v490
        %v517 = vpack.c.b16 %v493, %v492
        %v518 = vpack.c.b16 %v495, %v494
        %v519 = vpack.c.b16 %v497, %v496
        %v520 = vpack.c.b16 %v499, %v498
        %v521 = vpack.c.b16 %v501, %v500
        %v522 = vpack.c.b16 %v503, %v502
        %v523 = vpack.c.b16 %v505, %v504
        %v524 = vpack.c.b16 %v507, %v506
        %v525 = vpack.c.b16 %v509, %v508
        %542 = vmatpush.bf16.msra.mxu0 %v517
        %543 = vmatpush.bf16.msra.mxu0 %v516
        %544 = vmatpush.bf16.msra.mxu0 %v515
        %545 = vmatpush.bf16.msra.mxu0 %v514
        %546 = vmatpush.bf16.msra.mxu0 %v513
        %547 = vmatpush.bf16.msra.mxu0 %v512
        %548 = vmatpush.bf16.msra.mxu0 %v511
        %549 = vmatpush.bf16.msra.mxu0 %v510
        %550 = vmatmul.bf16.gmra.mxu0 %v408
        %v551 = vpop.f32.mrf.mxu0
        %v552 = vadd.f32 %v444, %v551
        %v553 = vpop.f32.mrf.mxu0
        %v554 = vadd.f32 %v444, %v553
        %555 = vdwg.mxu0
        %556 = vmatpush.bf16.msra.mxu0 %v525
        %557 = vmatpush.bf16.msra.mxu0 %v524
        %558 = vmatpush.bf16.msra.mxu0 %v523
        %559 = vmatpush.bf16.msra.mxu0 %v522
        %560 = vmatpush.bf16.msra.mxu0 %v521
        %561 = vmatpush.bf16.msra.mxu0 %v520
        %562 = vmatpush.bf16.msra.mxu0 %v519
        %563 = vmatpush.bf16.msra.mxu0 %v518
        %564 = vmatmul.bf16.gmra.mxu0 %v409
        %v565 = vpop.f32.mrf.mxu0
        %v566 = vadd.f32 %v552, %v565
        %v567 = vpop.f32.mrf.mxu0
        %v568 = vadd.f32 %v554, %v567
        %569 = vdwg.mxu0
        %v570 = vld [vmem:[%s5] sm:$0x1]
        %vm571 = vcmp.ne.s32.totalorder %v570, 0
        %v572 = vmul.f32 %v566, 1.442695
        %v573 = vpow.pop %v572
        %v574 = vmul.f32 %v568, 1.442695
        %v575 = vpow.pop %v574
        %v576 = vsel %vm571, 1, 0
        %v577 = vperm.slane %v576, 0
        %vm578 = vcmp.eq.s32.totalorder %v577, 1
        %v579 = vsel %vm578, %v566, %v573
        %v580 = vsel %vm578, %v568, %v575
        %581 = vst [vmem:[%s319] sm:$0xff] %v579
        %582 = vst [vmem:[%s319 + $0x8] sm:$0xff] %v580
        %s583 = sand.u32 %s164, 1
        %s584 = scalar_lea.sflag [#allocation4], %s583
        %s585 = sand.u32 %s164, 1
        %s586 = smul.addr %s585, 16
        %s587 = scalar_lea.vmem [#allocation10], %s586
        // Predicated region
        $region61: #{tpu_custom_call.1} parent=43 // pred_check
          %p588 = pneg %p174
        $region62: #{tpu_custom_call.1} parent=43 // pred_check_branch
          %590 = sbr.rel (%p588) target = $region64
        $region63: #{tpu_custom_call.1} parent=43 // pred_region
          %s591 = smul.u32 2, %s25
          %593 = vsyncadd %s584, 0
          %s594 = smul.addr %s591, 8
          %s595 = scalar_lea.hbm %s6, %s594
          %s596 = sshll.u32 %s587, 4
          %s597 = int_to_ptr.vmem [resolvable:$true] %s596
          %s598 = sshll.u32 %s595, 4
          %s599 = int_to_ptr.hbm [resolvable:$true] %s598
          %604 = dma.vmem_to_hbm [thread:$0]  %s597, 256, %s599, %s584, 128, 128, 8
        $region64: #{tpu_custom_call.1} parent=43 // pred_fallthru
          _
      $region44: #{tpu_custom_call.1} parent=5 // pred_fallthru
        _
      %p605 = scmp.le.s32.totalorder 2, %s20
      // Predicated region
      $region65: #{tpu_custom_call.1} parent=5 // pred_check
        %p606 = pneg %p605
      $region66: #{tpu_custom_call.1} parent=5 // pred_check_branch
        %608 = sbr.rel (%p606) target = $region68
      $region67: #{tpu_custom_call.1} parent=5 // pred_region
        %s609 = ssub.s32 %s20, 2
        // Predicated region
        $region69: #{tpu_custom_call.1} parent=67 // pred_check
          %p610 = pneg %p180
        $region70: #{tpu_custom_call.1} parent=67 // pred_check_branch
          %612 = sbr.rel (%p610) target = $region72
        $region71: #{tpu_custom_call.1} parent=67 // pred_region
          %s613 = sand.u32 %s165, 1
          %s614 = scalar_lea.sflag [#allocation4], %s613
          %s615 = sand.u32 %s165, 1
          %s616 = smul.addr %s615, 16
          %s617 = scalar_lea.vmem [#allocation10], %s616
          %619 = dma.done %s614, 256
        $region72: #{tpu_custom_call.1} parent=67 // pred_fallthru
          _
      $region68: #{tpu_custom_call.1} parent=5 // pred_fallthru
        _
    $region6: #{tpu_custom_call.1} parent=1 // loop_footer
      %s24 = sadd.s32 1, %s20
    $region7: #{tpu_custom_call.1} parent=1 // loop_footer_branch
      %19 = sbr.rel target = $region3
    $region8: #{tpu_custom_call.1} parent=1 // loop_exit
      _
    %620 = vsyncpa [#allocation3], 1
    %s621 = scalar_lea.sflag [#allocation3], 1
    %622 = vsyncpa %s621, 1
    %623 = vsyncpa [#allocation6], 1
    %624 = vsyncpa [#allocation9], 1
    %625 = vsyncpa [#allocation4], 1
    %s626 = scalar_lea.sflag [#allocation4], 1
    %627 = vsyncpa %s626, 1

// kernel: tpu_custom_call.1
$region0: #{tpu_custom_call.1}
  #allocation0 [shape = 'u32[]', space=smem, size = 0x4, offset = 0x4, fixed_abs, tag = 'smem constant byte address 0x4 - core index']
  #allocation1 [shape = 'u32[72,128]{1,0:T(1,128)}', space=vmem, size = 0x9000, scoped, tag = 'internal scratch']
  %s0 = inlined_call_operand.hbm [shape: bf16[32,48], index: 0, kind: input, shape index: {}]
  %s1 = inlined_call_operand.hbm [shape: bf16[48,256], index: 1, kind: input, shape index: {}]
  %s2 = inlined_call_operand.hbm [shape: f32[1,256], index: 2, kind: input, shape index: {}]
  %s3 = inlined_call_operand.hbm [shape: bf16[256,128], index: 3, kind: input, shape index: {}]
  %s4 = inlined_call_operand.vmem [shape: f32[1,128], index: 4, kind: input, shape index: {}]
  %s5 = inlined_call_operand.vmem [shape: s32[1,128], index: 5, kind: input, shape index: {}]
  %s6 = inlined_call_operand.hbm [shape: f32[32,128], index: 6, kind: output, shape index: {}]
  %s7 = sld [smem:[#allocation0]]
  $region73: #{tpu_custom_call.1} parent=0
    _
  %s9 = ssub.s32 1, %s7
  %s10 = scalar_select 0, %s9, %s7
  $region1: #{tpu_custom_call.1} parent=0
    #allocation2 [shape = 'u8[8192]{0}', space=vmem, size = 0x2000, scoped, tag = 'input window, operand 0']
    #allocation3 [shape = 's32[2]{0}', space=sflag, size = 0x8, scoped, tag = 'scoped memory for tpu_custom_call.1']
    #allocation4 [shape = 's32[2]{0}', space=sflag, size = 0x8, scoped, tag = 'scoped memory for tpu_custom_call.1']
    #allocation5 [shape = 'u8[24576]{0}', space=vmem, size = 0x6000, scoped, tag = 'input window, operand 1, single buffered']
    #allocation6 [shape = 's32[1]{0}', space=sflag, size = 0x4, scoped, tag = 'scoped memory for tpu_custom_call.1']
    #allocation7 [shape = 'u8[1024]{0}', space=vmem, size = 0x400, scoped, tag = 'input window, operand 2, single buffered']
    #allocation8 [shape = 'u8[65536]{0}', space=vmem, size = 0x10000, scoped, tag = 'input window, operand 3, single buffered']
    #allocation9 [shape = 's32[1]{0}', space=sflag, size = 0x4, scoped, tag = 'scoped memory for tpu_custom_call.1']
    #allocation10 [shape = 'u8[16384]{0}', space=vmem, size = 0x4000, scoped, tag = 'output window, operand 0']
    %11 = vsyncpa [#allocation3], 0
    %s12 = scalar_lea.sflag [#allocation3], 1
    %13 = vsyncpa %s12, 0
    %14 = vsyncpa [#allocation6], 0
    %15 = vsyncpa [#allocation9], 0
    %16 = vsyncpa [#allocation4], 0
    %s17 = scalar_lea.sflag [#allocation4], 1
    %18 = vsyncpa %s17, 0
    loop: start=0, step=1, limit=4
    $region2: #{tpu_custom_call.1} parent=1 // loop_pre_header
      _
    $region3: #{tpu_custom_call.1} parent=1 // loop_header
      %s20 = sphi 0, %s24
      %p21 = scmp.ge.s32.totalorder %s20, 4
      %s30 = sphi 0, %s32
      %s33 = sphi 0, %s30
      %s34 = sphi 0, %s33
      %s50 = sphi 0, %s34
      %s54 = sphi 0, %s54
      %s56 = sphi 0, %s54
      %s57 = sphi 0, %s56
      %s71 = sphi 0, %s57
      %s75 = sphi 0, %s75
      %s77 = sphi 0, %s75
      %s78 = sphi 0, %s77
      %s92 = sphi 0, %s78
      %s96 = sphi 0, %s96
      %s98 = sphi 0, %s96
      %s99 = sphi 0, %s98
      %s113 = sphi 0, %s99
      %s117 = sphi 0, %s117
      %s119 = sphi 0, %s117
      %s120 = sphi 0, %s119
      %s134 = sphi 0, %s120
      %s138 = sphi 0, %s138
      %s140 = sphi 0, %s138
      %s141 = sphi 0, %s140
      %s155 = sphi 0, %s141
      %s161 = sphi 0, %s163
      %s164 = sphi 0, %s161
      %s165 = sphi 0, %s164
      %s181 = sphi 0, %s165
    $region4: #{tpu_custom_call.1} parent=1 // loop_header_branch
      %23 = sbr.rel (%p21) target = $region8
    $region5: #{tpu_custom_call.1} parent=1 // loop_body
      %s25 = ssub.s32 %s20, 1
      %s26 = ssub.s32 %s20, 2
      %s27 = sadd.s32 %s20, 1
      %s28 = ssub.s32 %s20, %s27
      %p29 = scmp.eq.s32.totalorder %s28, 0
      %s31 = sadd.s32 %s30, 1
      %s32 = scalar_select %p29, %s30, %s31
      %p35 = pneg %p29
      %p36 = scmp.eq.s32.totalorder %s20, 1
      %p37 = por %p35, %p36
      %p38 = scmp.ne.s32.totalorder %s30, %s33
      %p39 = scmp.eq.s32.totalorder %s20, 0
      %p40 = por %p38, %p39
      %p41 = scmp.ne.s32.totalorder %s30, %s33
      %p42 = scmp.eq.s32.totalorder %s25, 1
      %p43 = por %p41, %p42
      %p44 = scmp.ne.s32.totalorder %s33, %s34
      %p45 = scmp.eq.s32.totalorder %s25, 0
      %p46 = por %p44, %p45
      %p47 = scmp.ne.s32.totalorder %s33, %s34
      %p48 = scmp.eq.s32.totalorder %s26, 1
      %p49 = por %p47, %p48
      %p51 = scmp.ne.s32.totalorder %s34, %s50
      %p52 = scmp.eq.s32.totalorder %s26, 0
      %p53 = por %p51, %p52
      %s55 = sadd.s32 %s54, 1
      %p58 = scmp.eq.s32.totalorder %s20, 1
      %p59 = scmp.ne.s32.totalorder %s54, %s56
      %p60 = scmp.eq.s32.totalorder %s20, 0
      %p61 = por %p59, %p60
      %p62 = scmp.ne.s32.totalorder %s54, %s56
      %p63 = scmp.eq.s32.totalorder %s25, 1
      %p64 = por %p62, %p63
      %p65 = scmp.ne.s32.totalorder %s56, %s57
      %p66 = scmp.eq.s32.totalorder %s25, 0
      %p67 = por %p65, %p66
      %p68 = scmp.ne.s32.totalorder %s56, %s57
      %p69 = scmp.eq.s32.totalorder %s26, 1
      %p70 = por %p68, %p69
      %p72 = scmp.ne.s32.totalorder %s57, %s71
      %p73 = scmp.eq.s32.totalorder %s26, 0
      %p74 = por %p72, %p73
      %s76 = sadd.s32 %s75, 1
      %p79 = scmp.eq.s32.totalorder %s20, 1
      %p80 = scmp.ne.s32.totalorder %s75, %s77
      %p81 = scmp.eq.s32.totalorder %s20, 0
      %p82 = por %p80, %p81
      %p83 = scmp.ne.s32.totalorder %s75, %s77
      %p84 = scmp.eq.s32.totalorder %s25, 1
      %p85 = por %p83, %p84
      %p86 = scmp.ne.s32.totalorder %s77, %s78
      %p87 = scmp.eq.s32.totalorder %s25, 0
      %p88 = por %p86, %p87
      %p89 = scmp.ne.s32.totalorder %s77, %s78
      %p90 = scmp.eq.s32.totalorder %s26, 1
      %p91 = por %p89, %p90
      %p93 = scmp.ne.s32.totalorder %s78, %s92
      %p94 = scmp.eq.s32.totalorder %s26, 0
      %p95 = por %p93, %p94
      %s97 = sadd.s32 %s96, 1
      %p100 = scmp.eq.s32.totalorder %s20, 1
      %p101 = scmp.ne.s32.totalorder %s96, %s98
      %p102 = scmp.eq.s32.totalorder %s20, 0
      %p103 = por %p101, %p102
      %p104 = scmp.ne.s32.totalorder %s96, %s98
      %p105 = scmp.eq.s32.totalorder %s25, 1
      %p106 = por %p104, %p105
      %p107 = scmp.ne.s32.totalorder %s98, %s99
      %p108 = scmp.eq.s32.totalorder %s25, 0
      %p109 = por %p107, %p108
      %p110 = scmp.ne.s32.totalorder %s98, %s99
      %p111 = scmp.eq.s32.totalorder %s26, 1
      %p112 = por %p110, %p111
      %p114 = scmp.ne.s32.totalorder %s99, %s113
      %p115 = scmp.eq.s32.totalorder %s26, 0
      %p116 = por %p114, %p115
      %s118 = sadd.s32 %s117, 1
      %p121 = scmp.eq.s32.totalorder %s20, 1
      %p122 = scmp.ne.s32.totalorder %s117, %s119
      %p123 = scmp.eq.s32.totalorder %s20, 0
      %p124 = por %p122, %p123
      %p125 = scmp.ne.s32.totalorder %s117, %s119
      %p126 = scmp.eq.s32.totalorder %s25, 1
      %p127 = por %p125, %p126
      %p128 = scmp.ne.s32.totalorder %s119, %s120
      %p129 = scmp.eq.s32.totalorder %s25, 0
      %p130 = por %p128, %p129
      %p131 = scmp.ne.s32.totalorder %s119, %s120
      %p132 = scmp.eq.s32.totalorder %s26, 1
      %p133 = por %p131, %p132
      %p135 = scmp.ne.s32.totalorder %s120, %s134
      %p136 = scmp.eq.s32.totalorder %s26, 0
      %p137 = por %p135, %p136
      %s139 = sadd.s32 %s138, 1
      %p142 = scmp.eq.s32.totalorder %s20, 1
      %p143 = scmp.ne.s32.totalorder %s138, %s140
      %p144 = scmp.eq.s32.totalorder %s20, 0
      %p145 = por %p143, %p144
      %p146 = scmp.ne.s32.totalorder %s138, %s140
      %p147 = scmp.eq.s32.totalorder %s25, 1
      %p148 = por %p146, %p147
      %p149 = scmp.ne.s32.totalorder %s140, %s141
      %p150 = scmp.eq.s32.totalorder %s25, 0
      %p151 = por %p149, %p150
      %p152 = scmp.ne.s32.totalorder %s140, %s141
      %p153 = scmp.eq.s32.totalorder %s26, 1
      %p154 = por %p152, %p153
      %p156 = scmp.ne.s32.totalorder %s141, %s155
      %p157 = scmp.eq.s32.totalorder %s26, 0
      %p158 = por %p156, %p157
      %s159 = ssub.s32 %s20, %s27
      %p160 = scmp.eq.s32.totalorder %s159, 0
      %s162 = sadd.s32 %s161, 1
      %s163 = scalar_select %p160, %s161, %s162
      %p166 = pneg %p160
      %p167 = scmp.eq.s32.totalorder %s20, 1
      %p168 = por %p166, %p167
      %p169 = scmp.ne.s32.totalorder %s161, %s164
      %p170 = scmp.eq.s32.totalorder %s20, 0
      %p171 = por %p169, %p170
      %p172 = scmp.ne.s32.totalorder %s161, %s164
      %p173 = scmp.eq.s32.totalorder %s25, 1
      %p174 = por %p172, %p173
      %p175 = scmp.ne.s32.totalorder %s164, %s165
      %p176 = scmp.eq.s32.totalorder %s25, 0
      %p177 = por %p175, %p176
      %p178 = scmp.ne.s32.totalorder %s164, %s165
      %p179 = scmp.eq.s32.totalorder %s26, 1
      %p180 = por %p178, %p179
      %p182 = scmp.ne.s32.totalorder %s165, %s181
      %p183 = scmp.eq.s32.totalorder %s26, 0
      %p184 = por %p182, %p183
      %p185 = scmp.le.s32.totalorder 1, %s20
      %p186 = scmp.lt.s32.totalorder %s20, 3
      %p187 = pnand %p185, %p186
      %p188 = pneg %p187
      // Predicated region
      $region9: #{tpu_custom_call.1} parent=5 // pred_check
        _
      $region10: #{tpu_custom_call.1} parent=5 // pred_check_branch
        %190 = sbr.rel (%p187) target = $region12
      $region11: #{tpu_custom_call.1} parent=5 // pred_region
        %s191 = ssub.s32 %s20, 1
        // Predicated region
        $region13: #{tpu_custom_call.1} parent=11 // pred_check
          %p192 = pneg %p67
        $region14: #{tpu_custom_call.1} parent=11 // pred_check_branch
          %194 = sbr.rel (%p192) target = $region16
        $region15: #{tpu_custom_call.1} parent=11 // pred_region
          %196 = vsyncadd [#allocation6], 0
          %s197 = sshll.u32 %s1, 4
          %s198 = int_to_ptr.hbm [resolvable:$true] %s197
          %s199 = sshll.u32 [#allocation5], 4
          %s200 = int_to_ptr.vmem [resolvable:$true] %s199
          %205 = dma.hbm_to_vmem [thread:$0]  %s198, 768, %s200, [#allocation6], 128, 128, 8
        $region16: #{tpu_custom_call.1} parent=11 // pred_fallthru
          _
        // Predicated region
        $region17: #{tpu_custom_call.1} parent=11 // pred_check
          %p206 = pneg %p88
        $region18: #{tpu_custom_call.1} parent=11 // pred_check_branch
          %208 = sbr.rel (%p206) target = $region20
        $region19: #{tpu_custom_call.1} parent=11 // pred_region
          %210 = vsyncadd [#allocation6], 0
          %s212 = sshll.u32 %s2, 4
          %s213 = int_to_ptr.hbm [resolvable:$true] %s212
          %s214 = sshll.u32 [#allocation7], 4
          %s215 = int_to_ptr.vmem [resolvable:$true] %s214
          %217 = dma.hbm_to_vmem [thread:$0]  %s213, 32, %s215, [#allocation6]
        $region20: #{tpu_custom_call.1} parent=11 // pred_fallthru
          _
        // Predicated region
        $region21: #{tpu_custom_call.1} parent=11 // pred_check
          %p218 = pneg %p109
        $region22: #{tpu_custom_call.1} parent=11 // pred_check_branch
          %220 = sbr.rel (%p218) target = $region24
        $region23: #{tpu_custom_call.1} parent=11 // pred_region
          %222 = vsyncadd [#allocation9], 0
          %s223 = sshll.u32 %s3, 4
          %s224 = int_to_ptr.hbm [resolvable:$true] %s223
          %s225 = sshll.u32 [#allocation8], 4
          %s226 = int_to_ptr.vmem [resolvable:$true] %s225
          %231 = dma.hbm_to_vmem [thread:$0]  %s224, 2048, %s226, [#allocation9], 64, 64, 4
        $region24: #{tpu_custom_call.1} parent=11 // pred_fallthru
          _
        // Predicated region
        $region25: #{tpu_custom_call.1} parent=11 // pred_check
          %p232 = pneg %p130
        $region26: #{tpu_custom_call.1} parent=11 // pred_check_branch
          %234 = sbr.rel (%p232) target = $region28
        $region27: #{tpu_custom_call.1} parent=11 // pred_region
          _
        $region28: #{tpu_custom_call.1} parent=11 // pred_fallthru
          _
        // Predicated region
        $region29: #{tpu_custom_call.1} parent=11 // pred_check
          %p235 = pneg %p151
        $region30: #{tpu_custom_call.1} parent=11 // pred_check_branch
          %237 = sbr.rel (%p235) target = $region32
        $region31: #{tpu_custom_call.1} parent=11 // pred_region
          _
        $region32: #{tpu_custom_call.1} parent=11 // pred_fallthru
          _
      $region12: #{tpu_custom_call.1} parent=5 // pred_fallthru
        _
      %p238 = scmp.lt.s32.totalorder %s20, 2
      // Predicated region
      $region33: #{tpu_custom_call.1} parent=5 // pred_check
        %p239 = pneg %p238
      $region34: #{tpu_custom_call.1} parent=5 // pred_check_branch
        %241 = sbr.rel (%p239) target = $region36
      $region35: #{tpu_custom_call.1} parent=5 // pred_region
        // Predicated region
        $region37: #{tpu_custom_call.1} parent=35 // pred_check
          %p242 = pneg %p40
        $region38: #{tpu_custom_call.1} parent=35 // pred_check_branch
          %244 = sbr.rel (%p242) target = $region40
        $region39: #{tpu_custom_call.1} parent=35 // pred_region
          %s245 = sand.u32 %s30, 1
          %s246 = scalar_lea.sflag [#allocation3], %s245
          %s247 = sand.u32 %s30, 1
          %s248 = smul.addr %s247, 8
          %s249 = scalar_lea.vmem [#allocation2], %s248
          %s250 = smul.u32 2, %s20
          %252 = vsyncadd %s246, 0
          %s253 = smul.addr %s250, 4
          %s254 = scalar_lea.hbm %s0, %s253
          %s255 = sshll.u32 %s254, 4
          %s256 = int_to_ptr.hbm [resolvable:$true] %s255
          %s257 = sshll.u32 %s249, 4
          %s258 = int_to_ptr.vmem [resolvable:$true] %s257
          %263 = dma.hbm_to_vmem [thread:$0]  %s256, 128, %s258, %s246, 64, 64, 4
        $region40: #{tpu_custom_call.1} parent=35 // pred_fallthru
          _
      $region36: #{tpu_custom_call.1} parent=5 // pred_fallthru
        _
      %p264 = scmp.le.s32.totalorder 1, %s20
      %p265 = scmp.lt.s32.totalorder %s20, 3
      %p266 = pnand %p264, %p265
      %p267 = pneg %p266
      // Predicated region
      $region41: #{tpu_custom_call.1} parent=5 // pred_check
        _
      $region42: #{tpu_custom_call.1} parent=5 // pred_check_branch
        %269 = sbr.rel (%p266) target = $region44
      $region43: #{tpu_custom_call.1} parent=5 // pred_region
        %s270 = ssub.s32 %s20, 1
        %s271 = sand.u32 %s33, 1
        %s272 = scalar_lea.sflag [#allocation3], %s271
        %s273 = sand.u32 %s33, 1
        %s274 = smul.addr %s273, 8
        %s275 = scalar_lea.vmem [#allocation2], %s274
        // Predicated region
        $region45: #{tpu_custom_call.1} parent=43 // pred_check
          %p276 = pneg %p46
        $region46: #{tpu_custom_call.1} parent=43 // pred_check_branch
          %278 = sbr.rel (%p276) target = $region48
        $region47: #{tpu_custom_call.1} parent=43 // pred_region
          %280 = dma.done %s272, 128
        $region48: #{tpu_custom_call.1} parent=43 // pred_fallthru
          _
        // Predicated region
        $region49: #{tpu_custom_call.1} parent=43 // pred_check
          %p281 = pneg %p67
        $region50: #{tpu_custom_call.1} parent=43 // pred_check_branch
          %283 = sbr.rel (%p281) target = $region52
        $region51: #{tpu_custom_call.1} parent=43 // pred_region
          %285 = dma.done [#allocation6], 768
        $region52: #{tpu_custom_call.1} parent=43 // pred_fallthru
          _
        // Predicated region
        $region53: #{tpu_custom_call.1} parent=43 // pred_check
          %p286 = pneg %p88
        $region54: #{tpu_custom_call.1} parent=43 // pred_check_branch
          %288 = sbr.rel (%p286) target = $region56
        $region55: #{tpu_custom_call.1} parent=43 // pred_region
          %290 = dma.done [#allocation6], 32
        $region56: #{tpu_custom_call.1} parent=43 // pred_fallthru
          _
        // Predicated region
        $region57: #{tpu_custom_call.1} parent=43 // pred_check
          %p291 = pneg %p109
        $region58: #{tpu_custom_call.1} parent=43 // pred_check_branch
          %293 = sbr.rel (%p291) target = $region60
        $region59: #{tpu_custom_call.1} parent=43 // pred_region
          %295 = dma.done [#allocation9], 2048
        $region60: #{tpu_custom_call.1} parent=43 // pred_fallthru
          _
        %s296 = sand.u32 %s33, 1
        %s297 = scalar_lea.sflag [#allocation3], %s296
        %s298 = sand.u32 %s33, 1
        %s299 = smul.addr %s298, 8
        %s300 = scalar_lea.vmem [#allocation2], %s299
        %p301 = pneg %p46
        %p302 = pneg %p43
        %p303 = pneg %p67
        %p304 = pneg %p64
        %p305 = pneg %p88
        %p306 = pneg %p85
        %p307 = pneg %p109
        %p308 = pneg %p106
        %p309 = pneg %p130
        %p310 = pneg %p127
        %p311 = pneg %p151
        %p312 = pneg %p148
        %p313 = pneg %p177
        %p314 = pneg %p174
        %s315 = sand.u32 %s164, 1
        %s316 = scalar_lea.sflag [#allocation4], %s315
        %s317 = sand.u32 %s164, 1
        %s318 = smul.addr %s317, 16
        %s319 = scalar_lea.vmem [#allocation10], %s318
        %s320 = smul.u32 2, %s25
        %s321 = smul.u32 2, %s25
        %v323 = vld [vmem:[%s275] sm:$0xf]
        %v324 = vld [vmem:[%s275 + $0x4] sm:$0xf]
        %v325 = vld [vmem:[#allocation5] sm:$0xff]
        %v326 = vld [vmem:[#allocation5 + $0x8] sm:$0xff]
        %v327 = vld [vmem:[#allocation5 + $0x10] sm:$0xff]
        %v328 = vld [vmem:[#allocation5 + $0x18] sm:$0xff]
        %v329 = vld [vmem:[#allocation5 + $0x20] sm:$0xff]
        %v330 = vld [vmem:[#allocation5 + $0x28] sm:$0xff]
        %v331 = vld [vmem:[#allocation7] sm:$0x3]
        %v333 = vperm.slane %v331, 0
        %v334 = vperm.slane %v331, 1
        %v339 = vunpack.c.l.b16 %v323
        %v340 = vunpack.c.l.b16 %v324
        %v341 = vpack.c.b16 %v340, %v339
        %v348 = vunpack.c.l.b16 %v325
        %v349 = vunpack.c.h.b16 %v325
        %v350 = vunpack.c.l.b16 %v326
        %v351 = vunpack.c.h.b16 %v326
        %v352 = vunpack.c.l.b16 %v327
        %v353 = vunpack.c.h.b16 %v327
        %v354 = vunpack.c.l.b16 %v328
        %v355 = vunpack.c.h.b16 %v328
        %v356 = vunpack.c.l.b16 %v329
        %v357 = vunpack.c.h.b16 %v329
        %v358 = vunpack.c.l.b16 %v330
        %v359 = vunpack.c.h.b16 %v330
        %v360 = vpack.c.b16 %v350, %v348
        %v361 = vpack.c.b16 %v351, %v349
        %v362 = vpack.c.b16 %v354, %v352
        %v363 = vpack.c.b16 %v355, %v353
        %v364 = vpack.c.b16 %v358, %v356
        %v365 = vpack.c.b16 %v359, %v357
        %vm372 = vcmask 392192
        %v374 = vsel %vm372, %v341, 0
        %376 = vmatpush.bf16.msra.mxu0 0
        %377 = vmatpush.bf16.msra.mxu0 0
        %378 = vmatpush.bf16.msra.mxu0 0
        %379 = vmatpush.bf16.msra.mxu0 0
        %380 = vmatpush.bf16.msra.mxu0 0
        %381 = vmatpush.bf16.msra.mxu0 %v364
        %382 = vmatpush.bf16.msra.mxu0 %v362
        %383 = vmatpush.bf16.msra.mxu0 %v360
        %384 = vmatmul.bf16.gmra.mxu0 %v374
        %v385 = vpop.f32.mrf.mxu0
        %v386 = vadd.f32 %v333, %v385
        %v387 = vpop.f32.mrf.mxu0
        %v388 = vadd.f32 %v333, %v387
        %389 = vdwg.mxu0
        %390 = vmatpush.bf16.msra.mxu0 0
        %391 = vmatpush.bf16.msra.mxu0 0
        %392 = vmatpush.bf16.msra.mxu0 0
        %393 = vmatpush.bf16.msra.mxu0 0
        %394 = vmatpush.bf16.msra.mxu0 0
        %395 = vmatpush.bf16.msra.mxu0 %v365
        %396 = vmatpush.bf16.msra.mxu0 %v363
        %397 = vmatpush.bf16.msra.mxu0 %v361
        %398 = vmatmul.bf16.gmra.mxu0 %v374
        %v399 = vpop.f32.mrf.mxu0
        %v400 = vadd.f32 %v334, %v399
        %v401 = vpop.f32.mrf.mxu0
        %v402 = vadd.f32 %v334, %v401
        %403 = vdwg.mxu0
        %v404 = vmax.f32 %v386, 0.0
        %v405 = vmax.f32 %v400, 0.0
        %v406 = vmax.f32 %v388, 0.0
        %v407 = vmax.f32 %v402, 0.0
        %v408 = vpack.c.bf16 %v406, %v404
        %v409 = vpack.c.bf16 %v407, %v405
        %v410 = vld [vmem:[#allocation8] sm:$0xf]
        %v411 = vld [vmem:[#allocation8 + $0x4] sm:$0xf]
        %v412 = vld [vmem:[#allocation8 + $0x8] sm:$0xf]
        %v413 = vld [vmem:[#allocation8 + $0xc] sm:$0xf]
        %v414 = vld [vmem:[#allocation8 + $0x10] sm:$0xf]
        %v415 = vld [vmem:[#allocation8 + $0x14] sm:$0xf]
        %v416 = vld [vmem:[#allocation8 + $0x18] sm:$0xf]
        %v417 = vld [vmem:[#allocation8 + $0x1c] sm:$0xf]
        %v418 = vld [vmem:[#allocation8 + $0x20] sm:$0xf]
        %v419 = vld [vmem:[#allocation8 + $0x24] sm:$0xf]
        %v420 = vld [vmem:[#allocation8 + $0x28] sm:$0xf]
        %v421 = vld [vmem:[#allocation8 + $0x2c] sm:$0xf]
        %v422 = vld [vmem:[#allocation8 + $0x30] sm:$0xf]
        %v423 = vld [vmem:[#allocation8 + $0x34] sm:$0xf]
        %v424 = vld [vmem:[#allocation8 + $0x38] sm:$0xf]
        %v425 = vld [vmem:[#allocation8 + $0x3c] sm:$0xf]
        %v426 = vld [vmem:[#allocation8 + $0x40] sm:$0xf]
        %v427 = vld [vmem:[#allocation8 + $0x44] sm:$0xf]
        %v428 = vld [vmem:[#allocation8 + $0x48] sm:$0xf]
        %v429 = vld [vmem:[#allocation8 + $0x4c] sm:$0xf]
        %v430 = vld [vmem:[#allocation8 + $0x50] sm:$0xf]
        %v431 = vld [vmem:[#allocation8 + $0x54] sm:$0xf]
        %v432 = vld [vmem:[#allocation8 + $0x58] sm:$0xf]
        %v433 = vld [vmem:[#allocation8 + $0x5c] sm:$0xf]
        %v434 = vld [vmem:[#allocation8 + $0x60] sm:$0xf]
        %v435 = vld [vmem:[#allocation8 + $0x64] sm:$0xf]
        %v436 = vld [vmem:[#allocation8 + $0x68] sm:$0xf]
        %v437 = vld [vmem:[#allocation8 + $0x6c] sm:$0xf]
        %v438 = vld [vmem:[#allocation8 + $0x70] sm:$0xf]
        %v439 = vld [vmem:[#allocation8 + $0x74] sm:$0xf]
        %v440 = vld [vmem:[#allocation8 + $0x78] sm:$0xf]
        %v441 = vld [vmem:[#allocation8 + $0x7c] sm:$0xf]
        %v442 = vld [vmem:[%s4] sm:$0x1]
        %v444 = vperm.slane %v442, 0
        %v478 = vunpack.c.l.b16 %v410
        %v479 = vunpack.c.l.b16 %v411
        %v480 = vunpack.c.l.b16 %v412
        %v481 = vunpack.c.l.b16 %v413
        %v482 = vunpack.c.l.b16 %v414
        %v483 = vunpack.c.l.b16 %v415
        %v484 = vunpack.c.l.b16 %v416
        %v485 = vunpack.c.l.b16 %v417
        %v486 = vunpack.c.l.b16 %v418
        %v487 = vunpack.c.l.b16 %v419
        %v488 = vunpack.c.l.b16 %v420
        %v489 = vunpack.c.l.b16 %v421
        %v490 = vunpack.c.l.b16 %v422
        %v491 = vunpack.c.l.b16 %v423
        %v492 = vunpack.c.l.b16 %v424
        %v493 = vunpack.c.l.b16 %v425
        %v494 = vunpack.c.l.b16 %v426
        %v495 = vunpack.c.l.b16 %v427
        %v496 = vunpack.c.l.b16 %v428
        %v497 = vunpack.c.l.b16 %v429
        %v498 = vunpack.c.l.b16 %v430
        %v499 = vunpack.c.l.b16 %v431
        %v500 = vunpack.c.l.b16 %v432
        %v501 = vunpack.c.l.b16 %v433
        %v502 = vunpack.c.l.b16 %v434
        %v503 = vunpack.c.l.b16 %v435
        %v504 = vunpack.c.l.b16 %v436
        %v505 = vunpack.c.l.b16 %v437
        %v506 = vunpack.c.l.b16 %v438
        %v507 = vunpack.c.l.b16 %v439
        %v508 = vunpack.c.l.b16 %v440
        %v509 = vunpack.c.l.b16 %v441
        %v510 = vpack.c.b16 %v479, %v478
        %v511 = vpack.c.b16 %v481, %v480
        %v512 = vpack.c.b16 %v483, %v482
        %v513 = vpack.c.b16 %v485, %v484
        %v514 = vpack.c.b16 %v487, %v486
        %v515 = vpack.c.b16 %v489, %v488
        %v516 = vpack.c.b16 %v491, %v490
        %v517 = vpack.c.b16 %v493, %v492
        %v518 = vpack.c.b16 %v495, %v494
        %v519 = vpack.c.b16 %v497, %v496
        %v520 = vpack.c.b16 %v499, %v498
        %v521 = vpack.c.b16 %v501, %v500
        %v522 = vpack.c.b16 %v503, %v502
        %v523 = vpack.c.b16 %v505, %v504
        %v524 = vpack.c.b16 %v507, %v506
        %v525 = vpack.c.b16 %v509, %v508
        %542 = vmatpush.bf16.msra.mxu0 %v517
        %543 = vmatpush.bf16.msra.mxu0 %v516
        %544 = vmatpush.bf16.msra.mxu0 %v515
        %545 = vmatpush.bf16.msra.mxu0 %v514
        %546 = vmatpush.bf16.msra.mxu0 %v513
        %547 = vmatpush.bf16.msra.mxu0 %v512
        %548 = vmatpush.bf16.msra.mxu0 %v511
        %549 = vmatpush.bf16.msra.mxu0 %v510
        %550 = vmatmul.bf16.gmra.mxu0 %v408
        %v551 = vpop.f32.mrf.mxu0
        %v552 = vadd.f32 %v444, %v551
        %v553 = vpop.f32.mrf.mxu0
        %v554 = vadd.f32 %v444, %v553
        %555 = vdwg.mxu0
        %556 = vmatpush.bf16.msra.mxu0 %v525
        %557 = vmatpush.bf16.msra.mxu0 %v524
        %558 = vmatpush.bf16.msra.mxu0 %v523
        %559 = vmatpush.bf16.msra.mxu0 %v522
        %560 = vmatpush.bf16.msra.mxu0 %v521
        %561 = vmatpush.bf16.msra.mxu0 %v520
        %562 = vmatpush.bf16.msra.mxu0 %v519
        %563 = vmatpush.bf16.msra.mxu0 %v518
        %564 = vmatmul.bf16.gmra.mxu0 %v409
        %v565 = vpop.f32.mrf.mxu0
        %v566 = vadd.f32 %v552, %v565
        %v567 = vpop.f32.mrf.mxu0
        %v568 = vadd.f32 %v554, %v567
        %569 = vdwg.mxu0
        %v570 = vld [vmem:[%s5] sm:$0x1]
        %vm571 = vcmp.ne.s32.totalorder %v570, 0
        %v572 = vmul.f32 %v566, 1.442695
        %v573 = vpow.pop %v572
        %v574 = vmul.f32 %v568, 1.442695
        %v575 = vpow.pop %v574
        %v576 = vsel %vm571, 1, 0
        %v577 = vperm.slane %v576, 0
        %vm578 = vcmp.eq.s32.totalorder %v577, 1
        %v579 = vsel %vm578, %v566, %v573
        %v580 = vsel %vm578, %v568, %v575
        %581 = vst [vmem:[%s319] sm:$0xff] %v579
        %582 = vst [vmem:[%s319 + $0x8] sm:$0xff] %v580
        %s583 = sand.u32 %s164, 1
        %s584 = scalar_lea.sflag [#allocation4], %s583
        %s585 = sand.u32 %s164, 1
        %s586 = smul.addr %s585, 16
        %s587 = scalar_lea.vmem [#allocation10], %s586
        // Predicated region
        $region61: #{tpu_custom_call.1} parent=43 // pred_check
          %p588 = pneg %p174
        $region62: #{tpu_custom_call.1} parent=43 // pred_check_branch
          %590 = sbr.rel (%p588) target = $region64
        $region63: #{tpu_custom_call.1} parent=43 // pred_region
          %s591 = smul.u32 2, %s25
          %593 = vsyncadd %s584, 0
          %s594 = smul.addr %s591, 8
          %s595 = scalar_lea.hbm %s6, %s594
          %s596 = sshll.u32 %s587, 4
          %s597 = int_to_ptr.vmem [resolvable:$true] %s596
          %s598 = sshll.u32 %s595, 4
          %s599 = int_to_ptr.hbm [resolvable:$true] %s598
          %604 = dma.vmem_to_hbm [thread:$0]  %s597, 256, %s599, %s584, 128, 128, 8
        $region64: #{tpu_custom_call.1} parent=43 // pred_fallthru
          _
      $region44: #{tpu_custom_call.1} parent=5 // pred_fallthru
        _
      %p605 = scmp.le.s32.totalorder 2, %s20
      // Predicated region
      $region65: #{tpu_custom_call.1} parent=5 // pred_check
        %p606 = pneg %p605
      $region66: #{tpu_custom_call.1} parent=5 // pred_check_branch
        %608 = sbr.rel (%p606) target = $region68
      $region67: #{tpu_custom_call.1} parent=5 // pred_region
        %s609 = ssub.s32 %s20, 2
        // Predicated region
        $region69: #{tpu_custom_call.1} parent=67 // pred_check
          %p610 = pneg %p180
        $region70: #{tpu_custom_call.1} parent=67 // pred_check_branch
          %612 = sbr.rel (%p610) target = $region72
        $region71: #{tpu_custom_call.1} parent=67 // pred_region
          %s613 = sand.u32 %s165, 1
          %s614 = scalar_lea.sflag [#allocation4], %s613
          %s615 = sand.u32 %s165, 1
          %s616 = smul.addr %s615, 16
          %s617 = scalar_lea.vmem [#allocation10], %s616
          %619 = dma.done %s614, 256
        $region72: #{tpu_custom_call.1} parent=67 // pred_fallthru
          _
      $region68: #{tpu_custom_call.1} parent=5 // pred_fallthru
        _
    $region6: #{tpu_custom_call.1} parent=1 // loop_footer
      %s24 = sadd.s32 1, %s20
    $region7: #{tpu_custom_call.1} parent=1 // loop_footer_branch
      %19 = sbr.rel target = $region3
    $region8: #{tpu_custom_call.1} parent=1 // loop_exit
      _
    %620 = vsyncpa [#allocation3], 1
    %s621 = scalar_lea.sflag [#allocation3], 1
    %622 = vsyncpa %s621, 1
    %623 = vsyncpa [#allocation6], 1
    %624 = vsyncpa [#allocation9], 1
    %625 = vsyncpa [#allocation4], 1
    %s626 = scalar_lea.sflag [#allocation4], 1
    %627 = vsyncpa %s626, 1

</llo_original>
